<compile_context>
chip_gen: v5e
topology: v5e:2x2
jax: 0.10.0
libtpu: 0.0.40
codegen_flags: <defaults>
</compile_context>

<pallas_src>
import functools

import jax
import jax.numpy as jnp
from jax.experimental import pallas as pl
from jax.experimental.pallas import tpu as pltpu

_LANE = 128
_BN_EPS = 1e-5


def _round_up(x, m):
    return ((x + m - 1) // m) * m


def _cdiv(a, b):
    return -(-a // b)


# ---------------------------------------------------------------------------
# Hardware-aware constants (resolved once, cached)
# ---------------------------------------------------------------------------
@functools.lru_cache(maxsize=1)
def _vmem_caps():
    """(budget_bytes, vmem_limit_bytes) from the physical VMEM capacity."""
    try:
        cap = int(pltpu.get_tpu_info().vmem_capacity_bytes)
    except Exception:
        cap = 64 * 1024 * 1024  # conservative (v7x-sized) default
    return int(cap * 0.70), int(cap * 0.85)


@functools.lru_cache(maxsize=1)
def _buffered_supported():
    """One-time feature probe: does pipeline_mode=pl.Buffered(1) lower on this
    jax/libtpu?  The real kernel is built exactly once with the result."""
    def _probe(a_ref, b_ref, o_ref):
        o_ref[...] = a_ref[...] + b_ref[...]

    try:
        fn = pl.pallas_call(
            _probe,
            out_shape=jax.ShapeDtypeStruct((8, 128), jnp.float32),
            grid_spec=pltpu.PrefetchScalarGridSpec(
                num_scalar_prefetch=0,
                grid=(1,),
                in_specs=[
                    pl.BlockSpec((8, 128), lambda i: (0, 0)),
                    pl.BlockSpec((8, 128), lambda i: (0, 0),
                                 pipeline_mode=pl.Buffered(1)),
                ],
                out_specs=pl.BlockSpec((8, 128), lambda i: (0, 0)),
            ),
        )
        z = jnp.zeros((8, 128), jnp.float32)
        jax.jit(fn).lower(z, z).compile()
        return True
    except Exception:
        return False


# ---------------------------------------------------------------------------
# Kernel
# ---------------------------------------------------------------------------
def _linear_block_kernel(x_ref, w1_ref, w2_ref, w3_ref, ph_ref, po_ref, o_ref):
    """Fused 3x (matmul + bias + ReLU), final folded-BN3 scale/shift."""
    # Per-feature parameter rows, read directly off the exactly-sized refs.
    b1 = ph_ref[0:1, :]   # (1, h_pad) f32
    b2 = ph_ref[1:2, :]
    b3 = po_ref[0:1, :]   # (1, o_pad) f32
    s3 = po_ref[1:2, :]
    t3 = po_ref[2:3, :]

    # x arrives f32 from HBM; cast to bf16 on the VPU (hidden under MXU work).
    x = x_ref[...].astype(jnp.bfloat16)

    h = jnp.dot(x, w1_ref[...], preferred_element_type=jnp.float32)
    h = jnp.maximum(h + b1, 0.0)                       # f32 epilogue (v5e-safe)

    h = jnp.dot(h.astype(jnp.bfloat16), w2_ref[...],
                preferred_element_type=jnp.float32)
    h = jnp.maximum(h + b2, 0.0)

    h = jnp.dot(h.astype(jnp.bfloat16), w3_ref[...],
                preferred_element_type=jnp.float32)
    h = jnp.maximum(h + b3, 0.0)

    o_ref[...] = (h * s3 + t3).astype(o_ref.dtype)     # BN3 (only unfolded BN)


# ---------------------------------------------------------------------------
# Tiling policy
# ---------------------------------------------------------------------------
def _choose_block_n(n, in_dim, h_pad, o_pad, budget):
    # Resident bf16 weights (+ tiny packed params); conservatively assume
    # default double-buffering.
    w_bytes = 2 * 2 * (in_dim * h_pad + h_pad * h_pad + h_pad * o_pad)
    w_bytes += 2 * 4 * 8 * (h_pad + o_pad)
    avail = budget - w_bytes
    if avail <= 0:
        # TODO(synk): fall back to a K/N-tiled grid with a VMEM accumulator
        # when the three weight matrices cannot stay resident in VMEM.
        raise ValueError(
            f"LinearBlock weights ({w_bytes / 2**20:.1f} MiB) exceed the VMEM "
            f"budget ({budget / 2**20:.1f} MiB); K/N tiling not implemented.")

    # Per batch-row VMEM bytes: double-buffered f32 x tile + bf16 cast copy,
    # f32 intermediates + their bf16 cast copies, double-buffered f32 out tile.
    per_row = (2 * 4 * in_dim + 2 * in_dim        # x (f32, 2 bufs) + bf16 copy
               + 2 * (4 + 2) * h_pad              # h1, h2 (f32 + bf16 copies)
               + 4 * o_pad                        # h3 (f32)
               + 2 * 4 * o_pad)                   # out tile (f32, 2 bufs)

    if n < 256:
        return _round_up(n, 8)                    # one lane/sublane-legal tile

    cap = max(_LANE, min(512, (avail // per_row) // _LANE * _LANE))
    target = _round_up(_cdiv(n, 4), _LANE)        # >=4 grid steps when possible
    return min(cap, max(_LANE, target))


# ---------------------------------------------------------------------------
# pallas_call construction (built + jitted once per static config)
# ---------------------------------------------------------------------------
def _build_call(*, n, in_dim, h_pad, o_pad, block_n, out_dtype, use_buffered,
                vmem_limit):
    def inv_spec(shape):
        # Blocks invariant across the grid: single-buffer when supported.
        if use_buffered:
            return pl.BlockSpec(shape, lambda i: (0, 0),
                                pipeline_mode=pl.Buffered(1))
        return pl.BlockSpec(shape, lambda i: (0, 0))

    grid = (pl.cdiv(n, block_n),)
    return pl.pallas_call(
        _linear_block_kernel,
        out_shape=jax.ShapeDtypeStruct((n, o_pad), out_dtype),
        grid_spec=pltpu.PrefetchScalarGridSpec(
            num_scalar_prefetch=0,
            grid=grid,
            in_specs=[
                pl.BlockSpec((block_n, in_dim), lambda i: (i, 0)),  # x tile (f32)
                inv_spec((in_dim, h_pad)),                          # w1 (bf16)
                inv_spec((h_pad, h_pad)),                           # w2 (bf16, BN1 folded)
                inv_spec((h_pad, o_pad)),                           # w3 (bf16, BN2 folded)
                inv_spec((8, h_pad)),                               # [b1; b2]
                inv_spec((8, o_pad)),                               # [b3; s3; t3]
            ],
            out_specs=pl.BlockSpec((block_n, o_pad), lambda i: (i, 0)),
        ),
        compiler_params=pltpu.CompilerParams(
            dimension_semantics=("parallel",),
            vmem_limit_bytes=int(vmem_limit),
        ),
    )


@functools.lru_cache(maxsize=None)
def _get_jitted(n, in_dim, h_pad, o_pad, block_n, out_dim, out_dtype_name,
                use_buffered, vmem_limit):
    out_dtype = jnp.dtype(out_dtype_name)
    call = _build_call(n=n, in_dim=in_dim, h_pad=h_pad, o_pad=o_pad,
                       block_n=block_n, out_dtype=out_dtype,
                       use_buffered=use_buffered, vmem_limit=vmem_limit)

    def fwd(x, w1, w2, w3, ph, po):
        out = call(x, w1, w2, w3, ph, po)
        return out[:, :out_dim]                 # fused column slice under jit

    return jax.jit(fwd)


def linear_block_forward(x, kparams, *, block_n=None):
    """x: [N, in_dim] (f32 or bf16). kparams: output of prepare_kernel_params."""
    n, in_dim = x.shape
    w1, w2, w3 = kparams["w1"], kparams["w2"], kparams["w3"]
    ph, po = kparams["ph"], kparams["po"]
    out_dim = kparams["out_dim"]
    assert w1.shape[0] == in_dim
    h_pad, o_pad = w1.shape[1], w3.shape[1]

    budget, vmem_limit = _vmem_caps()
    if block_n is None:
        block_n = _choose_block_n(n, in_dim, h_pad, o_pad, budget)

    fwd = _get_jitted(n, in_dim, h_pad, o_pad, int(block_n), out_dim,
                      str(x.dtype), _buffered_supported(), vmem_limit)
    return fwd(x, w1, w2, w3, ph, po)


# ---------------------------------------------------------------------------
# Parameters (PyTorch-style init) + BN folding / padding / packing
# ---------------------------------------------------------------------------
def init_torch_params(key, in_dim, hidden_dim, out_dim):
    """PyTorch-style Linear init; non-trivial BN running stats so eval-mode BN
    folding is actually exercised."""
    def linear(k, fan_in, fan_out):
        kw, kb = jax.random.split(k)
        bound = 1.0 / jnp.sqrt(fan_in)
        w = jax.random.uniform(kw, (fan_in, fan_out), jnp.float32, -bound, bound)
        b = jax.random.uniform(kb, (fan_out,), jnp.float32, -bound, bound)
        return w, b

    def bn(k, dim):
        kg, kb, km, kv = jax.random.split(k, 4)
        gamma = jax.random.uniform(kg, (dim,), jnp.float32, 0.5, 1.5)
        beta = jax.random.uniform(kb, (dim,), jnp.float32, -0.5, 0.5)
        mean = 0.5 * jax.random.normal(km, (dim,), jnp.float32)
        var = jax.random.uniform(kv, (dim,), jnp.float32, 0.5, 1.5)
        return gamma, beta, mean, var

    k = jax.random.split(key, 6)
    w1, b1 = linear(k[0], in_dim, hidden_dim)
    w2, b2 = linear(k[1], hidden_dim, hidden_dim)
    w3, b3 = linear(k[2], hidden_dim, out_dim)
    return dict(w1=w1, b1=b1, w2=w2, b2=b2, w3=w3, b3=b3,
                bn1=bn(k[3], hidden_dim), bn2=bn(k[4], hidden_dim),
                bn3=bn(k[5], out_dim))


def _bn_scale_shift(bn, eps=_BN_EPS):
    gamma, beta, mean, var = bn
    scale = gamma / jnp.sqrt(var + eps)
    shift = beta - mean * scale
    return scale, shift


def prepare_kernel_params(raw, eps=_BN_EPS):
    in_dim, hidden_dim = raw["w1"].shape
    out_dim = raw["w3"].shape[1]
    s1, t1 = _bn_scale_shift(raw["bn1"], eps)
    s2, t2 = _bn_scale_shift(raw["bn2"], eps)
    s3, t3 = _bn_scale_shift(raw["bn3"], eps)

    # Fold BN1 into layer 2 and BN2 into layer 3 (exact in f32).
    w2f = raw["w2"] * s1[:, None]
    b2f = t1 @ raw["w2"] + raw["b2"]
    w3f = raw["w3"] * s2[:, None]
    b3f = t2 @ raw["w3"] + raw["b3"]

    h_pad = _round_up(hidden_dim, _LANE)
    o_pad = _round_up(out_dim, _LANE)

    def pad_w(w, rows, cols):
        return jnp.pad(w, ((0, rows - w.shape[0]), (0, cols - w.shape[1])))

    w1p = pad_w(raw["w1"], in_dim, h_pad).astype(jnp.bfloat16)
    w2p = pad_w(w2f, h_pad, h_pad).astype(jnp.bfloat16)
    w3p = pad_w(w3f, h_pad, o_pad).astype(jnp.bfloat16)

    # Exactly-sized packed parameter slabs (f32), rows read directly in-kernel.
    ph = jnp.zeros((8, h_pad), jnp.float32)
    ph = ph.at[0, :hidden_dim].set(raw["b1"])
    ph = ph.at[1, :hidden_dim].set(b2f)
    po = jnp.zeros((8, o_pad), jnp.float32)
    po = po.at[0, :out_dim].set(b3f)
    po = po.at[1, :out_dim].set(s3)
    po = po.at[2, :out_dim].set(t3)

    return dict(w1=w1p, w2=w2p, w3=w3p, ph=ph, po=po, out_dim=out_dim)


def reference_forward(x, raw, eps=_BN_EPS):
    """Unfolded f32 reference: Linear -> ReLU -> BatchNorm1d (eval) per layer."""
    def layer(h, w, b, bn):
        gamma, beta, mean, var = bn
        h = jnp.maximum(h @ w + b, 0.0)
        return (h - mean) / jnp.sqrt(var + eps) * gamma + beta

    h = layer(x, raw["w1"], raw["b1"], raw["bn1"])
    h = layer(h, raw["w2"], raw["b2"], raw["bn2"])
    return layer(h, raw["w3"], raw["b3"], raw["bn3"])


if __name__ == "__main__":
    batch, in_dim, hidden_dim, out_dim = 8, 32, 64, 16

    key = jax.random.PRNGKey(0)
    kx, kp = jax.random.split(key)
    x = jax.random.normal(kx, (batch, in_dim), jnp.float32)

    raw = init_torch_params(kp, in_dim, hidden_dim, out_dim)
    kparams = prepare_kernel_params(raw)

    out = jax.block_until_ready(linear_block_forward(x, kparams))
    ref = reference_forward(x, raw)

    assert out.shape == (batch, out_dim)
    # bf16 weights/activations with f32 accumulation -> loosened tolerance.
    assert jnp.allclose(out, ref, atol=8e-2, rtol=5e-2), float(
        jnp.max(jnp.abs(out - ref)))

    print("KERNEL_OK")
</pallas_src>

<mosaic_0001>
module attributes {stable_mosaic.version = 11 : i64} {
  func.func @_linear_block_kernel(%arg0: i32, %arg1: memref<8x32xf32, #tpu.memory_space<vmem>>, %arg2: memref<32x128xbf16, #tpu.memory_space<vmem>>, %arg3: memref<128x128xbf16, #tpu.memory_space<vmem>>, %arg4: memref<128x128xbf16, #tpu.memory_space<vmem>>, %arg5: memref<8x128xf32, #tpu.memory_space<vmem>>, %arg6: memref<8x128xf32, #tpu.memory_space<vmem>>, %arg7: memref<8x128xf32, #tpu.memory_space<vmem>>) attributes {dimension_semantics = [#tpu.dimension_semantics<parallel>], iteration_bounds = array<i64: 1>, scalar_prefetch = 0 : i64, scratch_operands = 0 : i64, tpu.core_type = #tpu.core_type<tc>, window_params = [{transform_indices = @transform_0, window_bounds = array<i64: 8, 32>}, {pipeline_mode = #tpu.pipeline_mode<synchronous>, transform_indices = @transform_1, window_bounds = array<i64: 32, 128>}, {pipeline_mode = #tpu.pipeline_mode<synchronous>, transform_indices = @transform_2, window_bounds = array<i64: 128, 128>}, {pipeline_mode = #tpu.pipeline_mode<synchronous>, transform_indices = @transform_3, window_bounds = array<i64: 128, 128>}, {pipeline_mode = #tpu.pipeline_mode<synchronous>, transform_indices = @transform_4, window_bounds = array<i64: 8, 128>}, {pipeline_mode = #tpu.pipeline_mode<synchronous>, transform_indices = @transform_5, window_bounds = array<i64: 8, 128>}, {transform_indices = @transform_6, window_bounds = array<i64: 8, 128>}]} {
    %c0 = arith.constant 0 : index
    %c0_0 = arith.constant 0 : index
    %0 = vector.load %arg5[%c0, %c0_0] : memref<8x128xf32, #tpu.memory_space<vmem>>, vector<1x128xf32>
    %c1 = arith.constant 1 : index
    %c0_1 = arith.constant 0 : index
    %1 = vector.load %arg5[%c1, %c0_1] : memref<8x128xf32, #tpu.memory_space<vmem>>, vector<1x128xf32>
    %c0_2 = arith.constant 0 : index
    %c0_3 = arith.constant 0 : index
    %2 = vector.load %arg6[%c0_2, %c0_3] : memref<8x128xf32, #tpu.memory_space<vmem>>, vector<1x128xf32>
    %c1_4 = arith.constant 1 : index
    %c0_5 = arith.constant 0 : index
    %3 = vector.load %arg6[%c1_4, %c0_5] : memref<8x128xf32, #tpu.memory_space<vmem>>, vector<1x128xf32>
    %c2 = arith.constant 2 : index
    %c0_6 = arith.constant 0 : index
    %4 = vector.load %arg6[%c2, %c0_6] : memref<8x128xf32, #tpu.memory_space<vmem>>, vector<1x128xf32>
    %c0_7 = arith.constant 0 : index
    %c0_8 = arith.constant 0 : index
    %5 = vector.load %arg1[%c0_7, %c0_8] : memref<8x32xf32, #tpu.memory_space<vmem>>, vector<8x32xf32>
    %6 = arith.truncf %5 : vector<8x32xf32> to vector<8x32xbf16>
    %c0_9 = arith.constant 0 : index
    %c0_10 = arith.constant 0 : index
    %7 = vector.load %arg2[%c0_9, %c0_10] : memref<32x128xbf16, #tpu.memory_space<vmem>>, vector<32x128xbf16>
    %cst = arith.constant dense<0.000000e+00> : vector<8x128xf32>
    %8 = tpu.matmul %6, %7, %cst {dimension_numbers = #tpu.dot_dimension_numbers<[1], [0], [0], [1], [0, 0, 1, 1], [], []>} : vector<8x32xbf16>, vector<32x128xbf16>, vector<8x128xf32> -> vector<8x128xf32>
    %9 = vector.broadcast %0 : vector<1x128xf32> to vector<8x128xf32>
    %10 = arith.addf %8, %9 : vector<8x128xf32>
    %cst_11 = arith.constant 0.000000e+00 : f32
    %11 = vector.broadcast %cst_11 : f32 to vector<8x128xf32>
    %12 = arith.maximumf %10, %11 : vector<8x128xf32>
    %13 = arith.truncf %12 : vector<8x128xf32> to vector<8x128xbf16>
    %c0_12 = arith.constant 0 : index
    %c0_13 = arith.constant 0 : index
    %14 = vector.load %arg3[%c0_12, %c0_13] : memref<128x128xbf16, #tpu.memory_space<vmem>>, vector<128x128xbf16>
    %cst_14 = arith.constant dense<0.000000e+00> : vector<8x128xf32>
    %15 = tpu.matmul %13, %14, %cst_14 {dimension_numbers = #tpu.dot_dimension_numbers<[1], [0], [0], [1], [0, 0, 1, 1], [], []>} : vector<8x128xbf16>, vector<128x128xbf16>, vector<8x128xf32> -> vector<8x128xf32>
    %16 = vector.broadcast %1 : vector<1x128xf32> to vector<8x128xf32>
    %17 = arith.addf %15, %16 : vector<8x128xf32>
    %cst_15 = arith.constant 0.000000e+00 : f32
    %18 = vector.broadcast %cst_15 : f32 to vector<8x128xf32>
    %19 = arith.maximumf %17, %18 : vector<8x128xf32>
    %20 = arith.truncf %19 : vector<8x128xf32> to vector<8x128xbf16>
    %c0_16 = arith.constant 0 : index
    %c0_17 = arith.constant 0 : index
    %21 = vector.load %arg4[%c0_16, %c0_17] : memref<128x128xbf16, #tpu.memory_space<vmem>>, vector<128x128xbf16>
    %cst_18 = arith.constant dense<0.000000e+00> : vector<8x128xf32>
    %22 = tpu.matmul %20, %21, %cst_18 {dimension_numbers = #tpu.dot_dimension_numbers<[1], [0], [0], [1], [0, 0, 1, 1], [], []>} : vector<8x128xbf16>, vector<128x128xbf16>, vector<8x128xf32> -> vector<8x128xf32>
    %23 = vector.broadcast %2 : vector<1x128xf32> to vector<8x128xf32>
    %24 = arith.addf %22, %23 : vector<8x128xf32>
    %cst_19 = arith.constant 0.000000e+00 : f32
    %25 = vector.broadcast %cst_19 : f32 to vector<8x128xf32>
    %26 = arith.maximumf %24, %25 : vector<8x128xf32>
    %27 = vector.broadcast %3 : vector<1x128xf32> to vector<8x128xf32>
    %28 = arith.mulf %26, %27 : vector<8x128xf32>
    %29 = vector.broadcast %4 : vector<1x128xf32> to vector<8x128xf32>
    %30 = arith.addf %28, %29 : vector<8x128xf32>
    %c0_20 = arith.constant 0 : index
    %c0_21 = arith.constant 0 : index
    %31 = vector.load %arg7[%c0_20, %c0_21] : memref<8x128xf32, #tpu.memory_space<vmem>>, vector<8x128xf32>
    tpu.vector_store %arg7[%c0_20, %c0_21], %30 {strides = array<i32>} : memref<8x128xf32, #tpu.memory_space<vmem>>, vector<8x128xf32>,
    return
  }
  func.func @transform_0(%arg0: i32) -> (i32, i32) {
    %c0_i32 = arith.constant 0 : i32
    %c0_i32_0 = arith.constant 0 : i32
    return %arg0, %c0_i32 : i32, i32
  }
  func.func @transform_1(%arg0: i32) -> (i32, i32) {
    %c0_i32 = arith.constant 0 : i32
    %c0_i32_0 = arith.constant 0 : i32
    %c0_i32_1 = arith.constant 0 : i32
    return %c0_i32, %c0_i32_0 : i32, i32
  }
  func.func @transform_2(%arg0: i32) -> (i32, i32) {
    %c0_i32 = arith.constant 0 : i32
    %c0_i32_0 = arith.constant 0 : i32
    %c0_i32_1 = arith.constant 0 : i32
    return %c0_i32, %c0_i32_0 : i32, i32
  }
  func.func @transform_3(%arg0: i32) -> (i32, i32) {
    %c0_i32 = arith.constant 0 : i32
    %c0_i32_0 = arith.constant 0 : i32
    %c0_i32_1 = arith.constant 0 : i32
    return %c0_i32, %c0_i32_0 : i32, i32
  }
  func.func @transform_4(%arg0: i32) -> (i32, i32) {
    %c0_i32 = arith.constant 0 : i32
    %c0_i32_0 = arith.constant 0 : i32
    %c0_i32_1 = arith.constant 0 : i32
    return %c0_i32, %c0_i32_0 : i32, i32
  }
  func.func @transform_5(%arg0: i32) -> (i32, i32) {
    %c0_i32 = arith.constant 0 : i32
    %c0_i32_0 = arith.constant 0 : i32
    %c0_i32_1 = arith.constant 0 : i32
    return %c0_i32, %c0_i32_0 : i32, i32
  }
  func.func @transform_6(%arg0: i32) -> (i32, i32) {
    %c0_i32 = arith.constant 0 : i32
    %c0_i32_0 = arith.constant 0 : i32
    return %arg0, %c0_i32 : i32, i32
  }
}

</mosaic_0001>

<llo_original>
// kernel: fwd.1
$region0: #{fwd.1}
  #allocation0 [shape = 'u32[]', space=smem, size = 0x4, offset = 0x4, fixed_abs, tag = 'smem constant byte address 0x4 - core index']
  #allocation1 [shape = 'u32[72,128]{1,0:T(1,128)}', space=vmem, size = 0x9000, scoped, tag = 'internal scratch']
  %s0 = inlined_call_operand.hbm [shape: f32[8,32], index: 0, kind: input, shape index: {}]
  %s1 = inlined_call_operand.hbm [shape: bf16[32,128], index: 1, kind: input, shape index: {}]
  %s2 = inlined_call_operand.hbm [shape: bf16[128,128], index: 2, kind: input, shape index: {}]
  %s3 = inlined_call_operand.hbm [shape: bf16[128,128], index: 3, kind: input, shape index: {}]
  %s4 = inlined_call_operand.hbm [shape: f32[8,128], index: 4, kind: input, shape index: {}]
  %s5 = inlined_call_operand.hbm [shape: f32[8,128], index: 5, kind: input, shape index: {}]
  %s6 = inlined_call_operand.hbm [shape: f32[8,128], index: 6, kind: output, shape index: {}]
  %s7 = sld [smem:[#allocation0]]
  $region58: #{fwd.1} parent=0
    _
  %s9 = ssub.s32 1, %s7
  %s10 = scalar_select 0, %s9, %s7
  $region1: #{fwd.1} parent=0
    #allocation2 [shape = 'u8[4096]{0}', space=vmem, size = 0x1000, scoped, tag = 'input window, operand 0, single buffered']
    #allocation3 [shape = 's32[1]{0}', space=sflag, size = 0x4, scoped, tag = 'scoped memory for fwd.1']
    #allocation4 [shape = 's32[1]{0}', space=sflag, size = 0x4, scoped, tag = 'scoped memory for fwd.1']
    #allocation5 [shape = 'u8[8192]{0}', space=vmem, size = 0x2000, scoped, tag = 'input window, operand 1, single buffered']
    #allocation6 [shape = 's32[1]{0}', space=sflag, size = 0x4, scoped, tag = 'scoped memory for fwd.1']
    #allocation7 [shape = 'u8[32768]{0}', space=vmem, size = 0x8000, scoped, tag = 'input window, operand 2, single buffered']
    #allocation8 [shape = 'u8[32768]{0}', space=vmem, size = 0x8000, scoped, tag = 'input window, operand 3, single buffered']
    #allocation9 [shape = 's32[1]{0}', space=sflag, size = 0x4, scoped, tag = 'scoped memory for fwd.1']
    #allocation10 [shape = 'u8[4096]{0}', space=vmem, size = 0x1000, scoped, tag = 'input window, operand 4, single buffered']
    #allocation11 [shape = 'u8[4096]{0}', space=vmem, size = 0x1000, scoped, tag = 'input window, operand 5, single buffered']
    #allocation12 [shape = 's32[1]{0}', space=sflag, size = 0x4, scoped, tag = 'scoped memory for fwd.1']
    #allocation13 [shape = 'u8[4096]{0}', space=vmem, size = 0x1000, scoped, tag = 'output window, operand 0, single buffered']
    %11 = vsyncpa [#allocation3], 0
    %12 = vsyncpa [#allocation6], 0
    %13 = vsyncpa [#allocation9], 0
    %14 = vsyncpa [#allocation12], 0
    %15 = vsyncpa [#allocation4], 0
    // Predicated region
    $region2: #{fwd.1} parent=1 // pred_check
      _
    $region3: #{fwd.1} parent=1 // pred_check_branch
      %17 = sbr.rel (0) target = $region5
    $region4: #{fwd.1} parent=1 // pred_region
      %19 = vsyncadd [#allocation3], 0
      %s21 = sshll.u32 %s0, 4
      %s22 = int_to_ptr.hbm [resolvable:$true] %s21
      %s23 = sshll.u32 [#allocation2], 4
      %s24 = int_to_ptr.vmem [resolvable:$true] %s23
      %26 = dma.hbm_to_vmem [thread:$0]  %s22, 128, %s24, [#allocation3]
    $region5: #{fwd.1} parent=1 // pred_fallthru
      _
    // Predicated region
    $region6: #{fwd.1} parent=1 // pred_check
      _
    $region7: #{fwd.1} parent=1 // pred_check_branch
      %28 = sbr.rel (0) target = $region9
    $region8: #{fwd.1} parent=1 // pred_region
      %30 = vsyncadd [#allocation6], 0
      %s31 = sshll.u32 %s1, 4
      %s32 = int_to_ptr.hbm [resolvable:$true] %s31
      %s33 = sshll.u32 [#allocation5], 4
      %s34 = int_to_ptr.vmem [resolvable:$true] %s33
      %39 = dma.hbm_to_vmem [thread:$0]  %s32, 256, %s34, [#allocation6], 64, 64, 4
    $region9: #{fwd.1} parent=1 // pred_fallthru
      _
    // Predicated region
    $region10: #{fwd.1} parent=1 // pred_check
      _
    $region11: #{fwd.1} parent=1 // pred_check_branch
      %41 = sbr.rel (0) target = $region13
    $region12: #{fwd.1} parent=1 // pred_region
      %43 = vsyncadd [#allocation6], 0
      %s44 = sshll.u32 %s2, 4
      %s45 = int_to_ptr.hbm [resolvable:$true] %s44
      %s46 = sshll.u32 [#allocation7], 4
      %s47 = int_to_ptr.vmem [resolvable:$true] %s46
      %52 = dma.hbm_to_vmem [thread:$0]  %s45, 1024, %s47, [#allocation6], 64, 64, 4
    $region13: #{fwd.1} parent=1 // pred_fallthru
      _
    // Predicated region
    $region14: #{fwd.1} parent=1 // pred_check
      _
    $region15: #{fwd.1} parent=1 // pred_check_branch
      %54 = sbr.rel (0) target = $region17
    $region16: #{fwd.1} parent=1 // pred_region
      %56 = vsyncadd [#allocation9], 0
      %s57 = sshll.u32 %s3, 4
      %s58 = int_to_ptr.hbm [resolvable:$true] %s57
      %s59 = sshll.u32 [#allocation8], 4
      %s60 = int_to_ptr.vmem [resolvable:$true] %s59
      %65 = dma.hbm_to_vmem [thread:$0]  %s58, 1024, %s60, [#allocation9], 64, 64, 4
    $region17: #{fwd.1} parent=1 // pred_fallthru
      _
    // Predicated region
    $region18: #{fwd.1} parent=1 // pred_check
      _
    $region19: #{fwd.1} parent=1 // pred_check_branch
      %67 = sbr.rel (0) target = $region21
    $region20: #{fwd.1} parent=1 // pred_region
      %69 = vsyncadd [#allocation9], 0
      %s71 = sshll.u32 %s4, 4
      %s72 = int_to_ptr.hbm [resolvable:$true] %s71
      %s73 = sshll.u32 [#allocation10], 4
      %s74 = int_to_ptr.vmem [resolvable:$true] %s73
      %76 = dma.hbm_to_vmem [thread:$0]  %s72, 128, %s74, [#allocation9]
    $region21: #{fwd.1} parent=1 // pred_fallthru
      _
    // Predicated region
    $region22: #{fwd.1} parent=1 // pred_check
      _
    $region23: #{fwd.1} parent=1 // pred_check_branch
      %78 = sbr.rel (0) target = $region25
    $region24: #{fwd.1} parent=1 // pred_region
      %80 = vsyncadd [#allocation12], 0
      %s82 = sshll.u32 %s5, 4
      %s83 = int_to_ptr.hbm [resolvable:$true] %s82
      %s84 = sshll.u32 [#allocation11], 4
      %s85 = int_to_ptr.vmem [resolvable:$true] %s84
      %87 = dma.hbm_to_vmem [thread:$0]  %s83, 128, %s85, [#allocation12]
    $region25: #{fwd.1} parent=1 // pred_fallthru
      _
    // Predicated region
    $region26: #{fwd.1} parent=1 // pred_check
      _
    $region27: #{fwd.1} parent=1 // pred_check_branch
      %89 = sbr.rel (0) target = $region29
    $region28: #{fwd.1} parent=1 // pred_region
      %91 = dma.done [#allocation3], 128
    $region29: #{fwd.1} parent=1 // pred_fallthru
      _
    // Predicated region
    $region30: #{fwd.1} parent=1 // pred_check
      _
    $region31: #{fwd.1} parent=1 // pred_check_branch
      %93 = sbr.rel (0) target = $region33
    $region32: #{fwd.1} parent=1 // pred_region
      %95 = dma.done [#allocation6], 256
    $region33: #{fwd.1} parent=1 // pred_fallthru
      _
    // Predicated region
    $region34: #{fwd.1} parent=1 // pred_check
      _
    $region35: #{fwd.1} parent=1 // pred_check_branch
      %97 = sbr.rel (0) target = $region37
    $region36: #{fwd.1} parent=1 // pred_region
      %99 = dma.done [#allocation6], 1024
    $region37: #{fwd.1} parent=1 // pred_fallthru
      _
    // Predicated region
    $region38: #{fwd.1} parent=1 // pred_check
      _
    $region39: #{fwd.1} parent=1 // pred_check_branch
      %101 = sbr.rel (0) target = $region41
    $region40: #{fwd.1} parent=1 // pred_region
      %103 = dma.done [#allocation9], 1024
    $region41: #{fwd.1} parent=1 // pred_fallthru
      _
    // Predicated region
    $region42: #{fwd.1} parent=1 // pred_check
      _
    $region43: #{fwd.1} parent=1 // pred_check_branch
      %105 = sbr.rel (0) target = $region45
    $region44: #{fwd.1} parent=1 // pred_region
      %107 = dma.done [#allocation9], 128
    $region45: #{fwd.1} parent=1 // pred_fallthru
      _
    // Predicated region
    $region46: #{fwd.1} parent=1 // pred_check
      _
    $region47: #{fwd.1} parent=1 // pred_check_branch
      %109 = sbr.rel (0) target = $region49
    $region48: #{fwd.1} parent=1 // pred_region
      %111 = dma.done [#allocation12], 128
    $region49: #{fwd.1} parent=1 // pred_fallthru
      _
    %v113 = vld [vmem:[#allocation10] sm:$0x1]
    %v114 = vld [vmem:[#allocation10 + $0x1] sm:$0x1]
    %v115 = vld [vmem:[#allocation11] sm:$0x1]
    %v116 = vld [vmem:[#allocation11 + $0x1] sm:$0x1]
    %v117 = vld [vmem:[#allocation11 + $0x2] sm:$0x1]
    %v118 = vld [vmem:[#allocation2] sm:$0xff]
    %v119 = vpack.c.bf16 %v118, %v118
    %v120 = vld [vmem:[#allocation5] sm:$0xf]
    %v121 = vld [vmem:[#allocation5 + $0x4] sm:$0xf]
    %v122 = vld [vmem:[#allocation5 + $0x8] sm:$0xf]
    %v123 = vld [vmem:[#allocation5 + $0xc] sm:$0xf]
    %v124 = vperm.slane %v113, 0
    %v129 = vunpack.c.l.b16 %v120
    %v130 = vunpack.c.l.b16 %v121
    %v131 = vunpack.c.l.b16 %v122
    %v132 = vunpack.c.l.b16 %v123
    %v133 = vpack.c.b16 %v130, %v129
    %v134 = vpack.c.b16 %v132, %v131
    %vm137 = vcmask 261120
    %v139 = vsel %vm137, %v119, 0
    %141 = vmatpush.bf16.msra.mxu0 0
    %142 = vmatpush.bf16.msra.mxu0 0
    %143 = vmatpush.bf16.msra.mxu0 0
    %144 = vmatpush.bf16.msra.mxu0 0
    %145 = vmatpush.bf16.msra.mxu0 0
    %146 = vmatpush.bf16.msra.mxu0 0
    %147 = vmatpush.bf16.msra.mxu0 %v134
    %148 = vmatpush.bf16.msra.mxu0 %v133
    %149 = vmatmul.bf16.gmra.mxu0 %v139
    %v150 = vpop.f32.mrf.mxu0
    %v151 = vadd.f32 %v124, %v150
    %v152 = vpop.f32.mrf.mxu0
    %153 = vdwg.mxu0
    %v154 = vmax.f32 %v151, 0.0
    %v155 = vpack.c.bf16 %v154, %v154
    %v156 = vld [vmem:[#allocation7] sm:$0xf]
    %v157 = vld [vmem:[#allocation7 + $0x4] sm:$0xf]
    %v158 = vld [vmem:[#allocation7 + $0x8] sm:$0xf]
    %v159 = vld [vmem:[#allocation7 + $0xc] sm:$0xf]
    %v160 = vld [vmem:[#allocation7 + $0x10] sm:$0xf]
    %v161 = vld [vmem:[#allocation7 + $0x14] sm:$0xf]
    %v162 = vld [vmem:[#allocation7 + $0x18] sm:$0xf]
    %v163 = vld [vmem:[#allocation7 + $0x1c] sm:$0xf]
    %v164 = vld [vmem:[#allocation7 + $0x20] sm:$0xf]
    %v165 = vld [vmem:[#allocation7 + $0x24] sm:$0xf]
    %v166 = vld [vmem:[#allocation7 + $0x28] sm:$0xf]
    %v167 = vld [vmem:[#allocation7 + $0x2c] sm:$0xf]
    %v168 = vld [vmem:[#allocation7 + $0x30] sm:$0xf]
    %v169 = vld [vmem:[#allocation7 + $0x34] sm:$0xf]
    %v170 = vld [vmem:[#allocation7 + $0x38] sm:$0xf]
    %v171 = vld [vmem:[#allocation7 + $0x3c] sm:$0xf]
    %v172 = vperm.slane %v114, 0
    %v189 = vunpack.c.l.b16 %v156
    %v190 = vunpack.c.l.b16 %v157
    %v191 = vunpack.c.l.b16 %v158
    %v192 = vunpack.c.l.b16 %v159
    %v193 = vunpack.c.l.b16 %v160
    %v194 = vunpack.c.l.b16 %v161
    %v195 = vunpack.c.l.b16 %v162
    %v196 = vunpack.c.l.b16 %v163
    %v197 = vunpack.c.l.b16 %v164
    %v198 = vunpack.c.l.b16 %v165
    %v199 = vunpack.c.l.b16 %v166
    %v200 = vunpack.c.l.b16 %v167
    %v201 = vunpack.c.l.b16 %v168
    %v202 = vunpack.c.l.b16 %v169
    %v203 = vunpack.c.l.b16 %v170
    %v204 = vunpack.c.l.b16 %v171
    %v205 = vpack.c.b16 %v190, %v189
    %v206 = vpack.c.b16 %v192, %v191
    %v207 = vpack.c.b16 %v194, %v193
    %v208 = vpack.c.b16 %v196, %v195
    %v209 = vpack.c.b16 %v198, %v197
    %v210 = vpack.c.b16 %v200, %v199
    %v211 = vpack.c.b16 %v202, %v201
    %v212 = vpack.c.b16 %v204, %v203
    %221 = vmatpush.bf16.msra.mxu0 %v212
    %222 = vmatpush.bf16.msra.mxu0 %v211
    %223 = vmatpush.bf16.msra.mxu0 %v210
    %224 = vmatpush.bf16.msra.mxu0 %v209
    %225 = vmatpush.bf16.msra.mxu0 %v208
    %226 = vmatpush.bf16.msra.mxu0 %v207
    %227 = vmatpush.bf16.msra.mxu0 %v206
    %228 = vmatpush.bf16.msra.mxu0 %v205
    %229 = vmatmul.bf16.gmra.mxu0 %v155
    %v230 = vpop.f32.mrf.mxu0
    %v231 = vadd.f32 %v172, %v230
    %v232 = vpop.f32.mrf.mxu0
    %233 = vdwg.mxu0
    %v234 = vmax.f32 %v231, 0.0
    %v235 = vpack.c.bf16 %v234, %v234
    %v236 = vld [vmem:[#allocation8] sm:$0xf]
    %v237 = vld [vmem:[#allocation8 + $0x4] sm:$0xf]
    %v238 = vld [vmem:[#allocation8 + $0x8] sm:$0xf]
    %v239 = vld [vmem:[#allocation8 + $0xc] sm:$0xf]
    %v240 = vld [vmem:[#allocation8 + $0x10] sm:$0xf]
    %v241 = vld [vmem:[#allocation8 + $0x14] sm:$0xf]
    %v242 = vld [vmem:[#allocation8 + $0x18] sm:$0xf]
    %v243 = vld [vmem:[#allocation8 + $0x1c] sm:$0xf]
    %v244 = vld [vmem:[#allocation8 + $0x20] sm:$0xf]
    %v245 = vld [vmem:[#allocation8 + $0x24] sm:$0xf]
    %v246 = vld [vmem:[#allocation8 + $0x28] sm:$0xf]
    %v247 = vld [vmem:[#allocation8 + $0x2c] sm:$0xf]
    %v248 = vld [vmem:[#allocation8 + $0x30] sm:$0xf]
    %v249 = vld [vmem:[#allocation8 + $0x34] sm:$0xf]
    %v250 = vld [vmem:[#allocation8 + $0x38] sm:$0xf]
    %v251 = vld [vmem:[#allocation8 + $0x3c] sm:$0xf]
    %v252 = vperm.slane %v115, 0
    %v269 = vunpack.c.l.b16 %v236
    %v270 = vunpack.c.l.b16 %v237
    %v271 = vunpack.c.l.b16 %v238
    %v272 = vunpack.c.l.b16 %v239
    %v273 = vunpack.c.l.b16 %v240
    %v274 = vunpack.c.l.b16 %v241
    %v275 = vunpack.c.l.b16 %v242
    %v276 = vunpack.c.l.b16 %v243
    %v277 = vunpack.c.l.b16 %v244
    %v278 = vunpack.c.l.b16 %v245
    %v279 = vunpack.c.l.b16 %v246
    %v280 = vunpack.c.l.b16 %v247
    %v281 = vunpack.c.l.b16 %v248
    %v282 = vunpack.c.l.b16 %v249
    %v283 = vunpack.c.l.b16 %v250
    %v284 = vunpack.c.l.b16 %v251
    %v285 = vpack.c.b16 %v270, %v269
    %v286 = vpack.c.b16 %v272, %v271
    %v287 = vpack.c.b16 %v274, %v273
    %v288 = vpack.c.b16 %v276, %v275
    %v289 = vpack.c.b16 %v278, %v277
    %v290 = vpack.c.b16 %v280, %v279
    %v291 = vpack.c.b16 %v282, %v281
    %v292 = vpack.c.b16 %v284, %v283
    %301 = vmatpush.bf16.msra.mxu0 %v292
    %302 = vmatpush.bf16.msra.mxu0 %v291
    %303 = vmatpush.bf16.msra.mxu0 %v290
    %304 = vmatpush.bf16.msra.mxu0 %v289
    %305 = vmatpush.bf16.msra.mxu0 %v288
    %306 = vmatpush.bf16.msra.mxu0 %v287
    %307 = vmatpush.bf16.msra.mxu0 %v286
    %308 = vmatpush.bf16.msra.mxu0 %v285
    %309 = vmatmul.bf16.gmra.mxu0 %v235
    %v310 = vpop.f32.mrf.mxu0
    %v311 = vadd.f32 %v252, %v310
    %v312 = vpop.f32.mrf.mxu0
    %313 = vdwg.mxu0
    %v314 = vmax.f32 %v311, 0.0
    %v315 = vperm.slane %v116, 0
    %v316 = vmul.f32 %v314, %v315
    %v317 = vperm.slane %v117, 0
    %v318 = vadd.f32 %v316, %v317
    %319 = vst [vmem:[#allocation13] sm:$0xff] %v318
    // Predicated region
    $region50: #{fwd.1} parent=1 // pred_check
      _
    $region51: #{fwd.1} parent=1 // pred_check_branch
      %321 = sbr.rel (0) target = $region53
    $region52: #{fwd.1} parent=1 // pred_region
      %323 = vsyncadd [#allocation4], 0
      %s325 = sshll.u32 [#allocation13], 4
      %s326 = int_to_ptr.vmem [resolvable:$true] %s325
      %s327 = sshll.u32 %s6, 4
      %s328 = int_to_ptr.hbm [resolvable:$true] %s327
      %330 = dma.vmem_to_hbm [thread:$0]  %s326, 128, %s328, [#allocation4]
    $region53: #{fwd.1} parent=1 // pred_fallthru
      _
    // Predicated region
    $region54: #{fwd.1} parent=1 // pred_check
      _
    $region55: #{fwd.1} parent=1 // pred_check_branch
      %332 = sbr.rel (0) target = $region57
    $region56: #{fwd.1} parent=1 // pred_region
      %334 = dma.done [#allocation4], 128
    $region57: #{fwd.1} parent=1 // pred_fallthru
      _
    %335 = vsyncpa [#allocation3], 1
    %336 = vsyncpa [#allocation6], 1
    %337 = vsyncpa [#allocation9], 1
    %338 = vsyncpa [#allocation12], 1
    %339 = vsyncpa [#allocation4], 1

</llo_original>
